<compile_context>
chip_gen: v7x
topology: tpu7x:2x2x1
jax: 0.10.0
libtpu: 0.0.40
codegen_flags: <defaults>
</compile_context>

<pallas_src>
import functools

import jax
import jax.numpy as jnp
from jax.experimental import pallas as pl
from jax.experimental.pallas import tpu as pltpu

EMB_N = 3                 # num_embeddings
EMB_D = 100               # embedding_dim
N_CELLS = 9               # 3 x 3 board
IN_F = N_CELLS * EMB_D    # 900 (original fc1 fan-in)
H = 75
OUT_F = 9

K_EFF = N_CELLS * EMB_N   # 27  (folded fan-in: one-hot of the 9 cells)
K_PAD = 32                # lane-padded contraction dim (== full array dim)
O_PAD = 16                # lane-padded output dim (== full array dim)


def _cdiv(a, b):
    return -(-a // b)


def _round_up(n, m):
    return _cdiv(n, m) * m


def valuenet_kernel(oh_ref, w_ref, b_ref, o_ref):
    # One matmul per batch tile: bf16 x bf16 operands (single-pass MXU),
    # f32 accumulation, f32 bias add, f32 store.
    acc = jnp.dot(oh_ref[...], w_ref[...],
                  preferred_element_type=jnp.float32)     # [TB, 16] f32
    o_ref[...] = (acc + b_ref[...]).astype(o_ref.dtype)


def prepare_params(params):
    """Fold embedding + fc1 + fc2 + fc3 into one affine map and pad to tiles.

    Returns (w_fold_bf16 [32,16], b_fold_f32 [1,16]).  The fold is computed in
    f32 at HIGHEST precision; only the final weight is rounded to bf16 (one
    rounding instead of three bf16-truncated matmuls), and padding is with
    zeros so output columns 0..8 match the unpadded network.
    """
    emb, w1, b1, w2, b2, w3, b3 = params
    hi = jax.lax.Precision.HIGHEST

    # feats[b, p*100+d] = emb[x[b,p], d]
    #   => h1 = onehot(x) @ W1_eff + b1, W1_eff[p*3+v, h] = sum_d emb[v,d]*w1[p*100+d, h]
    w1_eff = jnp.einsum('vd,pdh->pvh', emb, w1.reshape(N_CELLS, EMB_D, H),
                        precision=hi).reshape(K_EFF, H)

    # No nonlinearity anywhere -> fold the three Linears into one affine map.
    w_fold = jnp.dot(jnp.dot(w1_eff, w2, precision=hi), w3, precision=hi)   # [27, 9]
    b_fold = jnp.dot(jnp.dot(b1, w2, precision=hi) + b2, w3, precision=hi) + b3  # [9]

    w_pad = jnp.zeros((K_PAD, O_PAD), jnp.float32).at[:K_EFF, :OUT_F].set(w_fold)
    b_pad = jnp.zeros((1, O_PAD), jnp.float32).at[0, :OUT_F].set(b_fold)
    return w_pad.astype(jnp.bfloat16), b_pad


@functools.partial(jax.jit, static_argnames=("tb",))
def valuenet_forward(x, params, tb=2048):
    """x: int32 [B, 3, 3] with values in {0,1,2}; returns float32 [B, 9]."""
    w_fold, b_fold = prepare_params(params)

    B = x.shape[0]
    # Batch tiling: TB a multiple of 16 (bf16 streamed input), capped by `tb`,
    # and >= 2 grid steps so both v7x TensorCores get work ("parallel" axis).
    tb = max(16, _round_up(tb, 16))
    B_req = _round_up(B, 16)
    n_steps = max(2, _cdiv(B_req, tb))
    TB = min(tb, _round_up(_cdiv(B_req, n_steps), 16))
    B_pad = n_steps * TB

    # One-hot the board: oh[b, p*3+v] = (x[b,p] == v).  Exact in bf16 (values
    # are 0/1).  Row ordering p*3+v matches the w1_eff fold above.  Kept in
    # the wrapper (fuses with the pad) rather than in-kernel — see header.
    board = x.reshape(B, N_CELLS)
    oh = (board[:, :, None] == jnp.arange(EMB_N, dtype=board.dtype)
          ).reshape(B, K_EFF).astype(jnp.bfloat16)
    oh = jnp.pad(oh, ((0, B_pad - B), (0, K_PAD - K_EFF)))          # [B_pad, 32]

    grid = (B_pad // TB,)
    stream = lambda shape: pl.BlockSpec(shape, lambda i: (i, 0))     # per-tile
    resident = lambda shape: pl.BlockSpec(shape, lambda i: (0, 0))   # VMEM-res.

    out = pl.pallas_call(
        valuenet_kernel,
        out_shape=jax.ShapeDtypeStruct((B_pad, O_PAD), jnp.float32),
        grid=grid,
        in_specs=[
            stream((TB, K_PAD)),          # one-hot board (bf16)
            resident((K_PAD, O_PAD)),     # folded weight (bf16)
            resident((1, O_PAD)),         # folded bias (f32)
        ],
        out_specs=stream((TB, O_PAD)),
        compiler_params=pltpu.CompilerParams(
            dimension_semantics=("parallel",),   # megacore sharding on v7x
        ),
    )(oh, w_fold, b_fold)

    return out[:B, :OUT_F]


def init_params(key):
    """Deterministic synthetic parameters with the module's shapes.

    nn.Embedding: weight ~ N(0,1); nn.Linear: U(-1/sqrt(fan_in), +1/sqrt(fan_in)).
    Linear weights are stored transposed ([in, out]) for the kernel/fold.
    """
    ks = jax.random.split(key, 7)
    emb = jax.random.normal(ks[0], (EMB_N, EMB_D), jnp.float32)

    def linear(kw, kb, fan_in, fan_out):
        bound = 1.0 / jnp.sqrt(fan_in)
        w = jax.random.uniform(kw, (fan_in, fan_out), jnp.float32, -bound, bound)
        b = jax.random.uniform(kb, (fan_out,), jnp.float32, -bound, bound)
        return w, b

    w1, b1 = linear(ks[1], ks[2], IN_F, H)
    w2, b2 = linear(ks[3], ks[4], H, H)
    w3, b3 = linear(ks[5], ks[6], H, OUT_F)
    return emb, w1, b1, w2, b2, w3, b3


if __name__ == "__main__":
    key = jax.random.PRNGKey(0)
    k_params, k_x, k_x2 = jax.random.split(key, 3)

    params = init_params(k_params)
    emb, w1, b1, w2, b2, w3, b3 = params

    def reference(xb):
        Bx = xb.shape[0]
        hi = jax.lax.Precision.HIGHEST
        r = jnp.take(emb, xb.reshape(Bx, N_CELLS), axis=0).reshape(Bx, IN_F)
        r = jnp.dot(r, w1, precision=hi) + b1
        r = jnp.dot(r, w2, precision=hi) + b2
        r = jnp.dot(r, w3, precision=hi) + b3
        return r

    # Tolerance: kernel uses bf16 MXU operands (per perf guidance), so each
    # output carries ~2^-9-relative rounding of 9 folded-weight rows (~few e-4
    # absolute) vs. the f32 HIGHEST reference.
    ATOL, RTOL = 2e-3, 1e-3

    # Primary check: tiny batch (same small shapes the module implies).
    B = 2
    x = jax.random.randint(k_x, (B, 3, 3), 0, 3, dtype=jnp.int32)
    out = jax.block_until_ready(valuenet_forward(x, params))
    assert out.shape == (B, OUT_F)
    assert jnp.allclose(out, reference(x), atol=ATOL, rtol=RTOL)

    # Secondary check: non-multiple-of-16 batch with a small tile so the
    # batch-tiled grid takes several steps (weights stay VMEM-resident).
    B2 = 50
    x2 = jax.random.randint(k_x2, (B2, 3, 3), 0, 3, dtype=jnp.int32)
    out2 = jax.block_until_ready(valuenet_forward(x2, params, tb=16))
    assert out2.shape == (B2, OUT_F)
    assert jnp.allclose(out2, reference(x2), atol=ATOL, rtol=RTOL)

    print("KERNEL_OK")
</pallas_src>

<mosaic_0001>
module attributes {stable_mosaic.version = 11 : i64} {
  func.func @valuenet_kernel(%arg0: i32, %arg1: memref<16x32xbf16, #tpu.memory_space<vmem>>, %arg2: memref<32x16xbf16, #tpu.memory_space<vmem>>, %arg3: memref<1x16xf32, #tpu.memory_space<vmem>>, %arg4: memref<16x16xf32, #tpu.memory_space<vmem>>) attributes {dimension_semantics = [#tpu.dimension_semantics<parallel>], iteration_bounds = array<i64: 2>, scalar_prefetch = 0 : i64, scratch_operands = 0 : i64, tpu.core_type = #tpu.core_type<tc>, window_params = [{transform_indices = @transform_0, window_bounds = array<i64: 16, 32>}, {pipeline_mode = #tpu.pipeline_mode<synchronous>, transform_indices = @transform_1, window_bounds = array<i64: 32, 16>}, {pipeline_mode = #tpu.pipeline_mode<synchronous>, transform_indices = @transform_2, window_bounds = array<i64: 1, 16>}, {transform_indices = @transform_3, window_bounds = array<i64: 16, 16>}]} {
    %c0 = arith.constant 0 : index
    %c0_0 = arith.constant 0 : index
    %0 = vector.load %arg1[%c0, %c0_0] : memref<16x32xbf16, #tpu.memory_space<vmem>>, vector<16x32xbf16>
    %c0_1 = arith.constant 0 : index
    %c0_2 = arith.constant 0 : index
    %1 = vector.load %arg2[%c0_1, %c0_2] : memref<32x16xbf16, #tpu.memory_space<vmem>>, vector<32x16xbf16>
    %cst = arith.constant dense<0.000000e+00> : vector<16x16xf32>
    %2 = tpu.matmul %0, %1, %cst {dimension_numbers = #tpu.dot_dimension_numbers<[1], [0], [0], [1], [0, 0, 1, 1], [], []>} : vector<16x32xbf16>, vector<32x16xbf16>, vector<16x16xf32> -> vector<16x16xf32>
    %c0_3 = arith.constant 0 : index
    %c0_4 = arith.constant 0 : index
    %3 = vector.load %arg3[%c0_3, %c0_4] : memref<1x16xf32, #tpu.memory_space<vmem>>, vector<1x16xf32>
    %4 = vector.broadcast %3 : vector<1x16xf32> to vector<16x16xf32>
    %5 = arith.addf %2, %4 : vector<16x16xf32>
    %c0_5 = arith.constant 0 : index
    %c0_6 = arith.constant 0 : index
    %6 = vector.load %arg4[%c0_5, %c0_6] : memref<16x16xf32, #tpu.memory_space<vmem>>, vector<16x16xf32>
    tpu.vector_store %arg4[%c0_5, %c0_6], %5 {strides = array<i32>} : memref<16x16xf32, #tpu.memory_space<vmem>>, vector<16x16xf32>,
    return
  }
  func.func @transform_0(%arg0: i32) -> (i32, i32) {
    %c0_i32 = arith.constant 0 : i32
    %c0_i32_0 = arith.constant 0 : i32
    return %arg0, %c0_i32 : i32, i32
  }
  func.func @transform_1(%arg0: i32) -> (i32, i32) {
    %c0_i32 = arith.constant 0 : i32
    %c0_i32_0 = arith.constant 0 : i32
    %c0_i32_1 = arith.constant 0 : i32
    return %c0_i32, %c0_i32_0 : i32, i32
  }
  func.func @transform_2(%arg0: i32) -> (i32, i32) {
    %c0_i32 = arith.constant 0 : i32
    %c0_i32_0 = arith.constant 0 : i32
    %c0_i32_1 = arith.constant 0 : i32
    return %c0_i32, %c0_i32_0 : i32, i32
  }
  func.func @transform_3(%arg0: i32) -> (i32, i32) {
    %c0_i32 = arith.constant 0 : i32
    %c0_i32_0 = arith.constant 0 : i32
    return %arg0, %c0_i32 : i32, i32
  }
}

</mosaic_0001>

<llo_original>
// kernel: eq.8
$region0: #{eq.8}
  %s0 = inlined_call_operand.vmem [shape: s32[2,3,3], index: 0, kind: input, shape index: {}]
  %s1 = inlined_call_operand.vmem [shape: s32[2,9], index: 1, kind: output, shape index: {}]
  $region1: #{eq.8} parent=0
    #allocation0 [shape = 'u8[4096]{0}', space=vmem, size = 0x1000, scoped, tag = 'scoped mem for output reshape']
    #allocation1 [shape = 'u8[8192]{0}', space=vmem, size = 0x2000, scoped, tag = 'scoped mem for input reshape']
    %s3 = sshllo.u32 0, 4
    %s4 = scalar_lea.vmem %s0, 4
    %v5 = vld [vmem:[%s4] sm:%s3]
    %s6 = scalar_lea.vmem [#allocation1], 8
    %7 = vst [vmem:[%s6] sm:%s3] %v5
    %v8 = vld [vmem:[%s0] sm:%s3]
    %9 = vst [vmem:[#allocation1] sm:%s3] %v8
    %s10 = smov 3
    %v11 = vld [vmem:[#allocation1] ss:$8 sm:%s10]
    %vm12 = vcmask 23552
    %13 = vst.msk [vmem:[#allocation0] sm:$0x3] %vm12, %v11
    %s14 = scalar_lea.vmem [#allocation1], 2
    %s15 = smov 3
    %v16 = vld [vmem:[%s14] ss:$8 sm:%s15]
    %17 = vrot.lane.b32.xlu0 %v16, 6
    %v18 = vpop.permute.xlu0 %17
    %vm19 = vcmask 72752
    %20 = vst.msk [vmem:[#allocation0] sm:$0x3] %vm19, %v18
    %s21 = scalar_lea.vmem [#allocation1], 1
    %s22 = smov 3
    %v23 = vld [vmem:[%s21] ss:$8 sm:%s22]
    %24 = vrot.lane.b32.xlu0 %v23, 3
    %v25 = vpop.permute.xlu0 %24
    %vm26 = vcmask 48152
    %27 = vst.msk [vmem:[#allocation0] sm:$0x3] %vm26, %v25
    %s29 = sshllo.u32 0, 2
    %v31 = vld [vmem:[#allocation0] sm:%s29]
    %s32 = sshllo.u32 0, 2
    %33 = vst [vmem:[%s1] sm:%s32] %v31

// kernel: valuenet_forward.1
$region0: #{valuenet_forward.1}
  #allocation0 [shape = 'u32[]', space=smem, size = 0x4, offset = 0x4, fixed_abs, tag = 'smem constant byte address 0x4 - core index']
  #allocation1 [shape = 'u32[144,128]{1,0:T(1,128)}', space=vmem, size = 0x12000, scoped, tag = 'internal scratch']
  %s0 = inlined_call_operand.vmem [shape: bf16[32,32], index: 0, kind: input, shape index: {}]
  %s1 = inlined_call_operand.vmem [shape: bf16[32,16], index: 1, kind: input, shape index: {}]
  %s2 = inlined_call_operand.vmem [shape: f32[1,16], index: 2, kind: input, shape index: {}]
  %s3 = inlined_call_operand.vmem [shape: f32[32,16], index: 3, kind: output, shape index: {}]
  %s4 = sld [smem:[#allocation0]]
  $region45: #{valuenet_forward.1} parent=0
    _
  %s6 = ssub.s32 1, %s4
  %s7 = scalar_select 0, %s6, %s4
  loop: start=0, step=1, limit=4
  $region2: #{valuenet_forward.1} parent=0 // loop_pre_header
    _
  $region3: #{valuenet_forward.1} parent=0 // loop_header
    %s9 = sphi 0, %s13
    %p10 = scmp.ge.s32.totalorder %s9, 4
    %s19 = sphi 0, %s21
    %s22 = sphi 0, %s19
    %s23 = sphi 0, %s22
    %s39 = sphi 0, %s23
    %s43 = sphi 0, %s43
    %s45 = sphi 0, %s43
    %s46 = sphi 0, %s45
    %s60 = sphi 0, %s46
    %s64 = sphi 0, %s64
    %s66 = sphi 0, %s64
    %s67 = sphi 0, %s66
    %s81 = sphi 0, %s67
    %s87 = sphi 0, %s89
    %s90 = sphi 0, %s87
    %s91 = sphi 0, %s90
    %s107 = sphi 0, %s91
  $region4: #{valuenet_forward.1} parent=0 // loop_header_branch
    %12 = sbr.rel (%p10) target = $region8
  $region5: #{valuenet_forward.1} parent=0 // loop_body
    %s14 = ssub.s32 %s9, 1
    %s15 = ssub.s32 %s9, 2
    %s16 = sadd.s32 %s9, 1
    %s17 = ssub.s32 %s9, %s16
    %p18 = scmp.eq.s32.totalorder %s17, 0
    %s20 = sadd.s32 %s19, 1
    %s21 = scalar_select %p18, %s19, %s20
    %p24 = pneg %p18
    %p25 = scmp.eq.s32.totalorder %s9, 1
    %p26 = por %p24, %p25
    %p27 = scmp.ne.s32.totalorder %s19, %s22
    %p28 = scmp.eq.s32.totalorder %s9, 0
    %p29 = por %p27, %p28
    %p30 = scmp.ne.s32.totalorder %s19, %s22
    %p31 = scmp.eq.s32.totalorder %s14, 1
    %p32 = por %p30, %p31
    %p33 = scmp.ne.s32.totalorder %s22, %s23
    %p34 = scmp.eq.s32.totalorder %s14, 0
    %p35 = por %p33, %p34
    %p36 = scmp.ne.s32.totalorder %s22, %s23
    %p37 = scmp.eq.s32.totalorder %s15, 1
    %p38 = por %p36, %p37
    %p40 = scmp.ne.s32.totalorder %s23, %s39
    %p41 = scmp.eq.s32.totalorder %s15, 0
    %p42 = por %p40, %p41
    %s44 = sadd.s32 %s43, 1
    %p47 = scmp.eq.s32.totalorder %s9, 1
    %p48 = scmp.ne.s32.totalorder %s43, %s45
    %p49 = scmp.eq.s32.totalorder %s9, 0
    %p50 = por %p48, %p49
    %p51 = scmp.ne.s32.totalorder %s43, %s45
    %p52 = scmp.eq.s32.totalorder %s14, 1
    %p53 = por %p51, %p52
    %p54 = scmp.ne.s32.totalorder %s45, %s46
    %p55 = scmp.eq.s32.totalorder %s14, 0
    %p56 = por %p54, %p55
    %p57 = scmp.ne.s32.totalorder %s45, %s46
    %p58 = scmp.eq.s32.totalorder %s15, 1
    %p59 = por %p57, %p58
    %p61 = scmp.ne.s32.totalorder %s46, %s60
    %p62 = scmp.eq.s32.totalorder %s15, 0
    %p63 = por %p61, %p62
    %s65 = sadd.s32 %s64, 1
    %p68 = scmp.eq.s32.totalorder %s9, 1
    %p69 = scmp.ne.s32.totalorder %s64, %s66
    %p70 = scmp.eq.s32.totalorder %s9, 0
    %p71 = por %p69, %p70
    %p72 = scmp.ne.s32.totalorder %s64, %s66
    %p73 = scmp.eq.s32.totalorder %s14, 1
    %p74 = por %p72, %p73
    %p75 = scmp.ne.s32.totalorder %s66, %s67
    %p76 = scmp.eq.s32.totalorder %s14, 0
    %p77 = por %p75, %p76
    %p78 = scmp.ne.s32.totalorder %s66, %s67
    %p79 = scmp.eq.s32.totalorder %s15, 1
    %p80 = por %p78, %p79
    %p82 = scmp.ne.s32.totalorder %s67, %s81
    %p83 = scmp.eq.s32.totalorder %s15, 0
    %p84 = por %p82, %p83
    %s85 = ssub.s32 %s9, %s16
    %p86 = scmp.eq.s32.totalorder %s85, 0
    %s88 = sadd.s32 %s87, 1
    %s89 = scalar_select %p86, %s87, %s88
    %p92 = pneg %p86
    %p93 = scmp.eq.s32.totalorder %s9, 1
    %p94 = por %p92, %p93
    %p95 = scmp.ne.s32.totalorder %s87, %s90
    %p96 = scmp.eq.s32.totalorder %s9, 0
    %p97 = por %p95, %p96
    %p98 = scmp.ne.s32.totalorder %s87, %s90
    %p99 = scmp.eq.s32.totalorder %s14, 1
    %p100 = por %p98, %p99
    %p101 = scmp.ne.s32.totalorder %s90, %s91
    %p102 = scmp.eq.s32.totalorder %s14, 0
    %p103 = por %p101, %p102
    %p104 = scmp.ne.s32.totalorder %s90, %s91
    %p105 = scmp.eq.s32.totalorder %s15, 1
    %p106 = por %p104, %p105
    %p108 = scmp.ne.s32.totalorder %s91, %s107
    %p109 = scmp.eq.s32.totalorder %s15, 0
    %p110 = por %p108, %p109
    %p111 = scmp.le.s32.totalorder 1, %s9
    %p112 = scmp.lt.s32.totalorder %s9, 3
    %p113 = pnand %p111, %p112
    %p114 = pneg %p113
    // Predicated region
    $region9: #{valuenet_forward.1} parent=5 // pred_check
      _
    $region10: #{valuenet_forward.1} parent=5 // pred_check_branch
      %116 = sbr.rel (%p113) target = $region12
    $region11: #{valuenet_forward.1} parent=5 // pred_region
      %s117 = ssub.s32 %s9, 1
      // Predicated region
      $region13: #{valuenet_forward.1} parent=11 // pred_check
        %p118 = pneg %p56
      $region14: #{valuenet_forward.1} parent=11 // pred_check_branch
        %120 = sbr.rel (%p118) target = $region16
      $region15: #{valuenet_forward.1} parent=11 // pred_region
        _
      $region16: #{valuenet_forward.1} parent=11 // pred_fallthru
        _
      // Predicated region
      $region17: #{valuenet_forward.1} parent=11 // pred_check
        %p121 = pneg %p77
      $region18: #{valuenet_forward.1} parent=11 // pred_check_branch
        %123 = sbr.rel (%p121) target = $region20
      $region19: #{valuenet_forward.1} parent=11 // pred_region
        _
      $region20: #{valuenet_forward.1} parent=11 // pred_fallthru
        _
    $region12: #{valuenet_forward.1} parent=5 // pred_fallthru
      _
    %p124 = scmp.lt.s32.totalorder %s9, 2
    // Predicated region
    $region21: #{valuenet_forward.1} parent=5 // pred_check
      %p125 = pneg %p124
    $region22: #{valuenet_forward.1} parent=5 // pred_check_branch
      %127 = sbr.rel (%p125) target = $region24
    $region23: #{valuenet_forward.1} parent=5 // pred_region
      // Predicated region
      $region25: #{valuenet_forward.1} parent=23 // pred_check
        %p128 = pneg %p29
      $region26: #{valuenet_forward.1} parent=23 // pred_check_branch
        %130 = sbr.rel (%p128) target = $region28
      $region27: #{valuenet_forward.1} parent=23 // pred_region
        %s131 = smul.u32 2, %s9
        %p132 = scmp.lt.s32.totalorder %s131, 3
        %s133 = scalar_select %p132, %s131, 3
        %s134 = smul.addr %s133, 4
        %s135 = scalar_lea.vmem %s0, %s134
        %s136 = smul.u32 2, %s9
      $region28: #{valuenet_forward.1} parent=23 // pred_fallthru
        _
    $region24: #{valuenet_forward.1} parent=5 // pred_fallthru
      _
    %p137 = scmp.le.s32.totalorder 1, %s9
    %p138 = scmp.lt.s32.totalorder %s9, 3
    %p139 = pnand %p137, %p138
    %p140 = pneg %p139
    // Predicated region
    $region29: #{valuenet_forward.1} parent=5 // pred_check
      _
    $region30: #{valuenet_forward.1} parent=5 // pred_check_branch
      %142 = sbr.rel (%p139) target = $region32
    $region31: #{valuenet_forward.1} parent=5 // pred_region
      %s143 = ssub.s32 %s9, 1
      %s144 = smul.u32 2, %s14
      %p145 = scmp.lt.s32.totalorder %s144, 3
      %s146 = scalar_select %p145, %s144, 3
      %s147 = smul.addr %s146, 4
      %s148 = scalar_lea.vmem %s0, %s147
      %p149 = pneg %p35
      %p150 = pneg %p32
      %p151 = pneg %p56
      %p152 = pneg %p53
      %p153 = pneg %p77
      %p154 = pneg %p74
      %p155 = pneg %p103
      %p156 = pneg %p100
      %s157 = smul.u32 2, %s14
      %p158 = scmp.lt.s32.totalorder %s157, 3
      %s159 = scalar_select %p158, %s157, 3
      %s160 = smul.addr %s159, 8
      %s161 = scalar_lea.vmem %s3, %s160
      %s162 = smul.u32 2, %s14
      %p163 = scmp.lt.s32.totalorder %s162, 3
      %s164 = scalar_select %p163, %s162, 3
      %s165 = smul.addr %s164, 4
      %s166 = scalar_lea.vmem %s0, %s165
      %s167 = smul.u32 2, %s14
      %s168 = smul.u32 2, %s14
      %p169 = scmp.lt.s32.totalorder %s168, 3
      %s170 = scalar_select %p169, %s168, 3
      %s171 = smul.addr %s170, 8
      %s172 = scalar_lea.vmem %s3, %s171
      %s173 = smul.u32 2, %s14
      %v175 = vld [vmem:[%s166] sm:$0xf]
      %v176 = vld [vmem:[%s166 + $0x4] sm:$0xf]
      %v177 = vld [vmem:[%s1] sm:$0xf]
      %v178 = vld [vmem:[%s1 + $0x4] sm:$0xf]
      %v179 = vld [vmem:[%s1 + $0x8] sm:$0xf]
      %v180 = vld [vmem:[%s1 + $0xc] sm:$0xf]
      %v181 = vld [vmem:[%s2] sm:$0x1]
      %v183 = vlaneseq
      %v184 = vshrl.u32 %v183, 7
      %v185 = vsub.s32 0, %v184
      %v186 = vrot.slane %v181, %v185
      %v190 = vunpack.c.l.b16 %v175
      %v191 = vunpack.c.l.b16 %v176
      %v192 = vpack.c.b16 %v191, %v190
      %v197 = vunpack.c.l.b16 %v177
      %v198 = vunpack.c.l.b16 %v178
      %v199 = vunpack.c.l.b16 %v179
      %v200 = vunpack.c.l.b16 %v180
      %v201 = vpack.c.b16 %v198, %v197
      %v202 = vpack.c.b16 %v200, %v199
      %vm205 = vcmask 261120
      %v207 = vsel %vm205, %v192, 0
      %209 = vmatprep.subr.bf16.mxu0 0
      %210 = vmatpush1.bf16.msra.mxu0 %v201
      %211 = vmatprep.subr.bf16.mxu0 0
      %212 = vmatpush1.bf16.msra.mxu0 %v202
      %213 = vmatprep.subr.bf16.mxu0 0
      %214 = vmatpush1.bf16.msra.mxu0 0
      %215 = vmatprep.subr.bf16.mxu0 0
      %216 = vmatpush1.bf16.msra.mxu0 0
      %217 = vmatprep.subr.bf16.mxu0 0
      %218 = vmatpush1.bf16.msra.mxu0 0
      %219 = vmatprep.subr.bf16.mxu0 0
      %220 = vmatpush1.bf16.msra.mxu0 0
      %221 = vmatprep.subr.bf16.mxu0 0
      %222 = vmatpush1.bf16.msra.mxu0 0
      %223 = vmatprep.subr.bf16.mxu0 0
      %224 = vmatpush1.bf16.msra.mxu0 0
      %225 = vmatprep.subr.bf16.mxu0 0
      %226 = vmatpush1.bf16.msra.mxu0 0
      %227 = vmatprep.subr.bf16.mxu0 0
      %228 = vmatpush1.bf16.msra.mxu0 0
      %229 = vmatprep.subr.bf16.mxu0 0
      %230 = vmatpush1.bf16.msra.mxu0 0
      %231 = vmatprep.subr.bf16.mxu0 0
      %232 = vmatpush1.bf16.msra.mxu0 0
      %233 = vmatprep.subr.bf16.mxu0 0
      %234 = vmatpush1.bf16.msra.mxu0 0
      %235 = vmatprep.subr.bf16.mxu0 0
      %236 = vmatpush1.bf16.msra.mxu0 0
      %237 = vmatprep.subr.bf16.mxu0 0
      %238 = vmatpush1.bf16.msra.mxu0 0
      %239 = vmatprep.subr.bf16.mxu0 0
      %240 = vmatpush1.bf16.msra.mxu0 0
      %241 = vmatprep.mubr.bf16.mxu0 0
      %242 = vmatmul.mubr.bf16.gmra.mrb[0].mxu0 %v207
      %v243 = vpop.f32.mrb[0].mxu0
      %v244 = vadd.f32 %v186, %v243
      %v245 = vpop.f32.mrb[0].mxu0
      %v246 = vpop.f32.mrb[0].mxu0
      %v247 = vadd.f32 %v186, %v246
      %v248 = vpop.f32.mrb[0].mxu0
      %249 = vdwg.mxu0
      %vm250 = vcmask 130048
      %251 = vst.msk [vmem:[%s172] sm:$0xff] %vm250, %v244
      %252 = vst.msk [vmem:[%s172 + $0x8] sm:$0xff] %vm250, %v247
      %s253 = smul.u32 2, %s14
      %p254 = scmp.lt.s32.totalorder %s253, 3
      %s255 = scalar_select %p254, %s253, 3
      %s256 = smul.addr %s255, 8
      %s257 = scalar_lea.vmem %s3, %s256
      // Predicated region
      $region33: #{valuenet_forward.1} parent=31 // pred_check
        %p258 = pneg %p100
      $region34: #{valuenet_forward.1} parent=31 // pred_check_branch
        %260 = sbr.rel (%p258) target = $region36
      $region35: #{valuenet_forward.1} parent=31 // pred_region
        %s261 = smul.u32 2, %s14
      $region36: #{valuenet_forward.1} parent=31 // pred_fallthru
        _
    $region32: #{valuenet_forward.1} parent=5 // pred_fallthru
      _
    %p262 = scmp.le.s32.totalorder 2, %s9
    // Predicated region
    $region37: #{valuenet_forward.1} parent=5 // pred_check
      %p263 = pneg %p262
    $region38: #{valuenet_forward.1} parent=5 // pred_check_branch
      %265 = sbr.rel (%p263) target = $region40
    $region39: #{valuenet_forward.1} parent=5 // pred_region
      %s266 = ssub.s32 %s9, 2
      // Predicated region
      $region41: #{valuenet_forward.1} parent=39 // pred_check
        %p267 = pneg %p106
      $region42: #{valuenet_forward.1} parent=39 // pred_check_branch
        %269 = sbr.rel (%p267) target = $region44
      $region43: #{valuenet_forward.1} parent=39 // pred_region
        %s270 = smul.u32 2, %s15
        %p271 = scmp.lt.s32.totalorder %s270, 3
        %s272 = scalar_select %p271, %s270, 3
        %s273 = smul.addr %s272, 8
        %s274 = scalar_lea.vmem %s3, %s273
      $region44: #{valuenet_forward.1} parent=39 // pred_fallthru
        _
    $region40: #{valuenet_forward.1} parent=5 // pred_fallthru
      _
  $region6: #{valuenet_forward.1} parent=0 // loop_footer
    %s13 = sadd.s32 1, %s9
  $region7: #{valuenet_forward.1} parent=0 // loop_footer_branch
    %8 = sbr.rel target = $region3
  $region8: #{valuenet_forward.1} parent=0 // loop_exit
    _

</llo_original>
